<compile_context>
chip_gen: v5e
topology: v5e:2x2
jax: 0.10.0
libtpu: 0.0.40
codegen_flags: <defaults>
</compile_context>

<pallas_src>
import math

import jax
import jax.numpy as jnp
from jax.experimental import pallas as pl
from jax.experimental.pallas import tpu as pltpu


def _cdiv(a, b):
    return -(-a // b)


def _fold_reduce(ss, F, C):
    """All-reduce the F lane segments of a (Bn, F*C) array via a log2 roll
    tree so every lane holds the per-channel total (replicated F times)."""
    k = 1
    while k < F:
        ss = ss + pltpu.roll(ss, shift=k * C, axis=1)
        k *= 2
    return ss


def _make_single_pass_kernel(F, C):
    def kernel(x_ref, gamma_ref, beta_ref, o_ref):
        # x_ref / o_ref: (Bn, HWf, F*C); gamma/beta: (1, F*C), pre-tiled.
        # Phase 1: per-(batch, fold-offset, channel) sum of squares from a
        # single read of x (no long-lived f32 copy of the block).
        ss = jnp.sum(jnp.square(x_ref[...].astype(jnp.float32)), axis=1)  # (Bn, F*C)
        ss = _fold_reduce(ss, F, C)                      # per-channel totals, lane-dense
        gx = jnp.sqrt(ss)                                # (Bn, F*C), L2 over (H, W)
        mean_gx = jnp.mean(gx, axis=-1, keepdims=True)   # (Bn, 1) == mean over C
        nx = gx / (mean_gx + 1e-6)                       # exact divide (tiny array)
        scale = gamma_ref[...] * nx + 1.0                # (Bn, F*C)
        # Phase 2: re-read x (VMEM-resident) and apply y = x*scale + beta.
        o_ref[...] = (x_ref[...].astype(jnp.float32) * scale[:, None, :]
                      + beta_ref[...]).astype(o_ref.dtype)

    return kernel


def _make_reduce_kernel(F, C):
    def kernel(x_ref, gamma_ref, scale_ref, acc_ref):
        # x_ref: (1, St, F*C); gamma: (1, F*C); scale_ref: (1, 1, F*C) f32;
        # acc_ref: (1, F*C) f32 scratch (persists across the spatial axis).
        s = pl.program_id(1)

        @pl.when(s == 0)
        def _():
            acc_ref[...] = jnp.zeros_like(acc_ref)

        acc_ref[...] += jnp.sum(jnp.square(x_ref[...].astype(jnp.float32)), axis=1)

        @pl.when(s == pl.num_programs(1) - 1)
        def _():
            ss = _fold_reduce(acc_ref[...], F, C)            # (1, F*C)
            gx = jnp.sqrt(ss)
            mean_gx = jnp.mean(gx, axis=-1, keepdims=True)
            nx = gx / (mean_gx + 1e-6)
            scale_ref[...] = (gamma_ref[...] * nx + 1.0)[:, None, :]

    return kernel


def _apply_kernel(x_ref, scale_ref, beta_ref, o_ref):
    # x_ref/o_ref: (1, St, F*C); scale: (1, 1, F*C); beta: (1, F*C).
    o_ref[...] = (x_ref[...].astype(jnp.float32) * scale_ref[...]
                  + beta_ref[...]).astype(o_ref.dtype)


def grn_pallas(x, gamma, beta, *, target_block_bytes=None, max_single_pass_bytes=None):
    """x: (N, H, W, C); gamma, beta: broadcastable to (1, 1, 1, C)."""
    N, H, W, C = x.shape
    HW = H * W
    itemsize = x.dtype.itemsize

    # ---- Generation-aware VMEM budget --------------------------------------
    vmem_cap = 128 * 1024 * 1024
    try:
        info = pltpu.get_tpu_info()
        cap = getattr(info, "vmem_capacity_bytes", None)
        if cap:
            vmem_cap = int(cap)
    except Exception:
        pass
    if vmem_cap >= 96 * 1024 * 1024:          # v5e / v6e: 128 MiB per TensorCore
        vmem_limit = 64 * 1024 * 1024
        tgt = 5 * 1024 * 1024
    else:                                     # v7x: 64 MiB per TensorCore
        vmem_limit = 40 * 1024 * 1024
        tgt = 5 * 1024 * 1024 // 2
    if target_block_bytes is not None:
        tgt = int(target_block_bytes)
    single_pass_cap = (vmem_limit // 6 if max_single_pass_bytes is None
                       else int(max_single_pass_bytes))

    # ---- Lane-dense fold: F spatial positions share a row, last dim F*C ----
    F = 128 // math.gcd(C, 128)               # power of two; (F*C) % 128 == 0
    FC = F * C
    HWf_raw = _cdiv(HW, F)                    # folded spatial rows (pre tile pad)
    per_batch_bytes = HWf_raw * FC * itemsize

    g2 = jnp.tile(jnp.reshape(gamma, (1, C)).astype(jnp.float32), (1, F))  # (1, F*C)
    b2 = jnp.tile(jnp.reshape(beta, (1, C)).astype(jnp.float32), (1, F))   # (1, F*C)

    def _pack(HWf, Npad):
        x2 = x.reshape(N, HW, C)
        pad_hw = HWf * F - HW
        pad_n = Npad - N
        if pad_hw or pad_n:
            # Zero padding is exact: zeros add nothing to the sum of squares,
            # and padded rows / batches are sliced away below.
            x2 = jnp.pad(x2, ((0, pad_n), (0, pad_hw), (0, 0)))
        return x2.reshape(Npad, HWf, FC)

    def _unpack(out3, HWf, Npad):
        y = out3.reshape(Npad, HWf * F, C)
        return y[:N, :HW].reshape(N, H, W, C)

    if per_batch_bytes <= single_pass_cap:
        # ---------------- single pass over HBM ------------------------------
        HWf = HWf_raw
        Bn = max(1, min(N, tgt // max(per_batch_bytes, 1)))
        if N >= 2:
            Bn = min(Bn, max(1, N // 2))      # keep >= 2 grid steps (megacore)
        N_grid = _cdiv(N, Bn)
        Npad = N_grid * Bn
        x3 = _pack(HWf, Npad)

        cost = pl.CostEstimate(
            flops=4 * N * HW * C,
            transcendentals=2 * N * C,
            bytes_accessed=2 * N * HW * C * itemsize,
        )
        out3 = pl.pallas_call(
            _make_single_pass_kernel(F, C),
            out_shape=jax.ShapeDtypeStruct((Npad, HWf, FC), x.dtype),
            grid_spec=pltpu.PrefetchScalarGridSpec(
                num_scalar_prefetch=0,
                grid=(N_grid,),
                in_specs=[
                    pl.BlockSpec((Bn, HWf, FC), lambda n: (n, 0, 0)),
                    pl.BlockSpec((1, FC), lambda n: (0, 0)),
                    pl.BlockSpec((1, FC), lambda n: (0, 0)),
                ],
                out_specs=pl.BlockSpec((Bn, HWf, FC), lambda n: (n, 0, 0)),
            ),
            compiler_params=pltpu.CompilerParams(
                dimension_semantics=("parallel",),
                vmem_limit_bytes=vmem_limit,
            ),
            cost_estimate=cost,
        )(x3, g2, b2)
        return _unpack(out3, HWf, Npad)

    # ---------------- two-pass spatial split (huge images / v7x) ------------
    St = tgt // (FC * itemsize)
    St = max(8, (St // 8) * 8)                # sublane-aligned spatial tile
    if St >= HWf_raw:
        St = max(8, ((_cdiv(HWf_raw, 2) + 7) // 8) * 8)
    S_grid = _cdiv(HWf_raw, St)
    HWf = S_grid * St
    Npad = N
    x3 = _pack(HWf, Npad)

    reduce_cost = pl.CostEstimate(
        flops=2 * N * HW * C,
        transcendentals=2 * N * C,
        bytes_accessed=N * HW * C * itemsize,
    )
    scale = pl.pallas_call(
        _make_reduce_kernel(F, C),
        out_shape=jax.ShapeDtypeStruct((Npad, 1, FC), jnp.float32),
        grid_spec=pltpu.PrefetchScalarGridSpec(
            num_scalar_prefetch=0,
            grid=(Npad, S_grid),
            in_specs=[
                pl.BlockSpec((1, St, FC), lambda n, s: (n, s, 0)),
                pl.BlockSpec((1, FC), lambda n, s: (0, 0)),
            ],
            out_specs=pl.BlockSpec((1, 1, FC), lambda n, s: (n, 0, 0)),
            scratch_shapes=[pltpu.VMEM((1, FC), jnp.float32)],
        ),
        compiler_params=pltpu.CompilerParams(
            dimension_semantics=("parallel", "arbitrary"),
            vmem_limit_bytes=vmem_limit,
        ),
        cost_estimate=reduce_cost,
    )(x3, g2)

    apply_cost = pl.CostEstimate(
        flops=2 * N * HW * C,
        transcendentals=0,
        bytes_accessed=2 * N * HW * C * itemsize,
    )
    out3 = pl.pallas_call(
        _apply_kernel,
        out_shape=jax.ShapeDtypeStruct((Npad, HWf, FC), x.dtype),
        grid_spec=pltpu.PrefetchScalarGridSpec(
            num_scalar_prefetch=0,
            grid=(Npad, S_grid),
            in_specs=[
                pl.BlockSpec((1, St, FC), lambda n, s: (n, s, 0)),
                pl.BlockSpec((1, 1, FC), lambda n, s: (n, 0, 0)),
                pl.BlockSpec((1, FC), lambda n, s: (0, 0)),
            ],
            out_specs=pl.BlockSpec((1, St, FC), lambda n, s: (n, s, 0)),
        ),
        compiler_params=pltpu.CompilerParams(
            dimension_semantics=("parallel", "parallel"),
            vmem_limit_bytes=vmem_limit,
        ),
        cost_estimate=apply_cost,
    )(x3, scale, b2)
    return _unpack(out3, HWf, Npad)


def grn_ref(x, gamma, beta):
    # Pure-JAX reference mirroring the PyTorch forward exactly.
    gx = jnp.sqrt(jnp.sum(x * x, axis=(1, 2), keepdims=True))        # (N,1,1,C)
    nx = gx / (jnp.mean(gx, axis=-1, keepdims=True) + 1e-6)          # (N,1,1,C)
    return gamma * (x * nx) + beta + x


if __name__ == "__main__":
    N, H, W, C = 2, 16, 16, 32
    key = jax.random.PRNGKey(0)
    kx, kg, kb = jax.random.split(key, 3)

    x = jax.random.normal(kx, (N, H, W, C), dtype=jnp.float32)
    # Module __init__ uses zeros; use small deterministic random values so the
    # affine path is actually exercised.
    gamma = 0.1 * jax.random.normal(kg, (1, 1, 1, C), dtype=jnp.float32)
    beta = 0.1 * jax.random.normal(kb, (1, 1, 1, C), dtype=jnp.float32)

    ref = grn_ref(x, gamma, beta)

    # Main (single-pass) path.
    out = jax.block_until_ready(grn_pallas(x, gamma, beta))
    assert out.shape == (N, H, W, C)
    err = float(jnp.max(jnp.abs(out - ref)))
    assert jnp.allclose(out, ref, atol=1e-5, rtol=1e-5), err

    # Also exercise the spatial-split two-pass fallback (large-image / v7x
    # path) at this small size to make sure it runs clean and matches.
    out2 = jax.block_until_ready(
        grn_pallas(x, gamma, beta, max_single_pass_bytes=1,
                   target_block_bytes=8 * 1024))
    err2 = float(jnp.max(jnp.abs(out2 - ref)))
    assert jnp.allclose(out2, ref, atol=1e-5, rtol=1e-5), err2

    print("KERNEL_OK")
</pallas_src>

<mosaic_0001>
module attributes {stable_mosaic.version = 11 : i64} {
  func.func @kernel(%arg0: i32, %arg1: memref<1x64x128xf32, #tpu.memory_space<vmem>>, %arg2: memref<1x128xf32, #tpu.memory_space<vmem>>, %arg3: memref<1x128xf32, #tpu.memory_space<vmem>>, %arg4: memref<1x64x128xf32, #tpu.memory_space<vmem>>) attributes {dimension_semantics = [#tpu.dimension_semantics<parallel>], iteration_bounds = array<i64: 2>, scalar_prefetch = 0 : i64, scratch_operands = 0 : i64, tpu.core_type = #tpu.core_type<tc>, window_params = [{transform_indices = @transform_0, window_bounds = array<i64: 1, 64, 128>}, {pipeline_mode = #tpu.pipeline_mode<synchronous>, transform_indices = @transform_1, window_bounds = array<i64: 1, 128>}, {pipeline_mode = #tpu.pipeline_mode<synchronous>, transform_indices = @transform_2, window_bounds = array<i64: 1, 128>}, {transform_indices = @transform_3, window_bounds = array<i64: 1, 64, 128>}]} {
    %c0 = arith.constant 0 : index
    %c0_0 = arith.constant 0 : index
    %c0_1 = arith.constant 0 : index
    %0 = vector.load %arg1[%c0, %c0_0, %c0_1] : memref<1x64x128xf32, #tpu.memory_space<vmem>>, vector<1x64x128xf32>
    %1 = arith.mulf %0, %0 : vector<1x64x128xf32>
    %cst = arith.constant dense<0.000000e+00> : vector<1x128xf32>
    %2 = vector.multi_reduction <add>, %1, %cst [1] : vector<1x64x128xf32> to vector<1x128xf32>
    %c32_i32 = arith.constant 32 : i32
    %3 = tpu.dynamic_rotate %2 by %c32_i32 dim 1 : vector<1x128xf32>, i32 -> vector<1x128xf32>
    %4 = arith.addf %2, %3 : vector<1x128xf32>
    %c64_i32 = arith.constant 64 : i32
    %5 = tpu.dynamic_rotate %4 by %c64_i32 dim 1 : vector<1x128xf32>, i32 -> vector<1x128xf32>
    %6 = arith.addf %4, %5 : vector<1x128xf32>
    %7 = math.sqrt %6 : vector<1x128xf32>
    %cst_2 = arith.constant dense<0.000000e+00> : vector<1xf32>
    %8 = vector.multi_reduction <add>, %7, %cst_2 [1] : vector<1x128xf32> to vector<1xf32>
    %9 = vector.shape_cast %8 : vector<1xf32> to vector<1x1xf32>
    %cst_3 = arith.constant 1.280000e+02 : f32
    %10 = vector.broadcast %cst_3 : f32 to vector<1x1xf32>
    %11 = arith.divf %9, %10 : vector<1x1xf32>
    %cst_4 = arith.constant 9.99999997E-7 : f32
    %12 = vector.broadcast %cst_4 : f32 to vector<1x1xf32>
    %13 = arith.addf %11, %12 : vector<1x1xf32>
    %14 = vector.broadcast %13 : vector<1x1xf32> to vector<1x128xf32>
    %15 = arith.divf %7, %14 : vector<1x128xf32>
    %c0_5 = arith.constant 0 : index
    %c0_6 = arith.constant 0 : index
    %16 = vector.load %arg2[%c0_5, %c0_6] : memref<1x128xf32, #tpu.memory_space<vmem>>, vector<1x128xf32>
    %17 = arith.mulf %16, %15 : vector<1x128xf32>
    %cst_7 = arith.constant 1.000000e+00 : f32
    %18 = vector.broadcast %cst_7 : f32 to vector<1x128xf32>
    %19 = arith.addf %17, %18 : vector<1x128xf32>
    %c0_8 = arith.constant 0 : index
    %c0_9 = arith.constant 0 : index
    %c0_10 = arith.constant 0 : index
    %20 = vector.load %arg1[%c0_8, %c0_9, %c0_10] : memref<1x64x128xf32, #tpu.memory_space<vmem>>, vector<1x64x128xf32>
    %21 = vector.shape_cast %19 : vector<1x128xf32> to vector<1x1x128xf32>
    %22 = vector.broadcast %21 : vector<1x1x128xf32> to vector<1x64x128xf32>
    %23 = arith.mulf %20, %22 : vector<1x64x128xf32>
    %c0_11 = arith.constant 0 : index
    %c0_12 = arith.constant 0 : index
    %24 = vector.load %arg3[%c0_11, %c0_12] : memref<1x128xf32, #tpu.memory_space<vmem>>, vector<1x128xf32>
    %25 = vector.shape_cast %24 : vector<1x128xf32> to vector<1x1x128xf32>
    %26 = vector.broadcast %25 : vector<1x1x128xf32> to vector<1x64x128xf32>
    %27 = arith.addf %23, %26 : vector<1x64x128xf32>
    %c0_13 = arith.constant 0 : index
    %c0_14 = arith.constant 0 : index
    %c0_15 = arith.constant 0 : index
    %28 = vector.load %arg4[%c0_13, %c0_14, %c0_15] : memref<1x64x128xf32, #tpu.memory_space<vmem>>, vector<1x64x128xf32>
    tpu.vector_store %arg4[%c0_13, %c0_14, %c0_15], %27 {strides = array<i32>} : memref<1x64x128xf32, #tpu.memory_space<vmem>>, vector<1x64x128xf32>,
    return
  }
  func.func @transform_0(%arg0: i32) -> (i32, i32, i32) {
    %c0_i32 = arith.constant 0 : i32
    %c0_i32_0 = arith.constant 0 : i32
    %c0_i32_1 = arith.constant 0 : i32
    return %arg0, %c0_i32, %c0_i32_0 : i32, i32, i32
  }
  func.func @transform_1(%arg0: i32) -> (i32, i32) {
    %c0_i32 = arith.constant 0 : i32
    %c0_i32_0 = arith.constant 0 : i32
    %c0_i32_1 = arith.constant 0 : i32
    return %c0_i32, %c0_i32_0 : i32, i32
  }
  func.func @transform_2(%arg0: i32) -> (i32, i32) {
    %c0_i32 = arith.constant 0 : i32
    %c0_i32_0 = arith.constant 0 : i32
    %c0_i32_1 = arith.constant 0 : i32
    return %c0_i32, %c0_i32_0 : i32, i32
  }
  func.func @transform_3(%arg0: i32) -> (i32, i32, i32) {
    %c0_i32 = arith.constant 0 : i32
    %c0_i32_0 = arith.constant 0 : i32
    %c0_i32_1 = arith.constant 0 : i32
    return %arg0, %c0_i32, %c0_i32_0 : i32, i32, i32
  }
}

</mosaic_0001>

<llo_original>
// kernel: tpu_custom_call.1
$region0: #{tpu_custom_call.1}
  #allocation0 [shape = 'u32[]', space=smem, size = 0x4, offset = 0x4, fixed_abs, tag = 'smem constant byte address 0x4 - core index']
  #allocation1 [shape = 'u32[72,128]{1,0:T(1,128)}', space=vmem, size = 0x9000, scoped, tag = 'internal scratch']
  %s0 = inlined_call_operand.hbm [shape: f32[2,64,128], index: 0, kind: input, shape index: {}]
  %s1 = inlined_call_operand.hbm [shape: f32[1,128], index: 1, kind: input, shape index: {}]
  %s2 = inlined_call_operand.vmem [shape: f32[1,128], index: 2, kind: input, shape index: {}]
  %s3 = inlined_call_operand.hbm [shape: f32[2,64,128], index: 3, kind: output, shape index: {}]
  %s4 = sld [smem:[#allocation0]]
  $region53: #{tpu_custom_call.1} parent=0
    _
  %s6 = ssub.s32 1, %s4
  %s7 = scalar_select 0, %s6, %s4
  $region1: #{tpu_custom_call.1} parent=0
    #allocation2 [shape = 'u8[65536]{0}', space=vmem, size = 0x10000, scoped, tag = 'input window, operand 0']
    #allocation3 [shape = 's32[2]{0}', space=sflag, size = 0x8, scoped, tag = 'scoped memory for tpu_custom_call.1']
    #allocation4 [shape = 's32[2]{0}', space=sflag, size = 0x8, scoped, tag = 'scoped memory for tpu_custom_call.1']
    #allocation5 [shape = 'u8[512]{0}', space=vmem, size = 0x400, scoped, tag = 'input window, operand 1, single buffered']
    #allocation6 [shape = 's32[1]{0}', space=sflag, size = 0x4, scoped, tag = 'scoped memory for tpu_custom_call.1']
    #allocation7 [shape = 'u8[65536]{0}', space=vmem, size = 0x10000, scoped, tag = 'output window, operand 0']
    %8 = vsyncpa [#allocation3], 0
    %s9 = scalar_lea.sflag [#allocation3], 1
    %10 = vsyncpa %s9, 0
    %11 = vsyncpa [#allocation6], 0
    %12 = vsyncpa [#allocation4], 0
    %s13 = scalar_lea.sflag [#allocation4], 1
    %14 = vsyncpa %s13, 0
    loop: start=0, step=1, limit=4
    $region2: #{tpu_custom_call.1} parent=1 // loop_pre_header
      _
    $region3: #{tpu_custom_call.1} parent=1 // loop_header
      %s16 = sphi 0, %s20
      %p17 = scmp.ge.s32.totalorder %s16, 4
      %s26 = sphi 0, %s28
      %s29 = sphi 0, %s26
      %s30 = sphi 0, %s29
      %s46 = sphi 0, %s30
      %s50 = sphi 0, %s50
      %s52 = sphi 0, %s50
      %s53 = sphi 0, %s52
      %s67 = sphi 0, %s53
      %s71 = sphi 0, %s71
      %s73 = sphi 0, %s71
      %s74 = sphi 0, %s73
      %s88 = sphi 0, %s74
      %s94 = sphi 0, %s96
      %s97 = sphi 0, %s94
      %s98 = sphi 0, %s97
      %s114 = sphi 0, %s98
    $region4: #{tpu_custom_call.1} parent=1 // loop_header_branch
      %19 = sbr.rel (%p17) target = $region8
    $region5: #{tpu_custom_call.1} parent=1 // loop_body
      %s21 = ssub.s32 %s16, 1
      %s22 = ssub.s32 %s16, 2
      %s23 = sadd.s32 %s16, 1
      %s24 = ssub.s32 %s16, %s23
      %p25 = scmp.eq.s32.totalorder %s24, 0
      %s27 = sadd.s32 %s26, 1
      %s28 = scalar_select %p25, %s26, %s27
      %p31 = pneg %p25
      %p32 = scmp.eq.s32.totalorder %s16, 1
      %p33 = por %p31, %p32
      %p34 = scmp.ne.s32.totalorder %s26, %s29
      %p35 = scmp.eq.s32.totalorder %s16, 0
      %p36 = por %p34, %p35
      %p37 = scmp.ne.s32.totalorder %s26, %s29
      %p38 = scmp.eq.s32.totalorder %s21, 1
      %p39 = por %p37, %p38
      %p40 = scmp.ne.s32.totalorder %s29, %s30
      %p41 = scmp.eq.s32.totalorder %s21, 0
      %p42 = por %p40, %p41
      %p43 = scmp.ne.s32.totalorder %s29, %s30
      %p44 = scmp.eq.s32.totalorder %s22, 1
      %p45 = por %p43, %p44
      %p47 = scmp.ne.s32.totalorder %s30, %s46
      %p48 = scmp.eq.s32.totalorder %s22, 0
      %p49 = por %p47, %p48
      %s51 = sadd.s32 %s50, 1
      %p54 = scmp.eq.s32.totalorder %s16, 1
      %p55 = scmp.ne.s32.totalorder %s50, %s52
      %p56 = scmp.eq.s32.totalorder %s16, 0
      %p57 = por %p55, %p56
      %p58 = scmp.ne.s32.totalorder %s50, %s52
      %p59 = scmp.eq.s32.totalorder %s21, 1
      %p60 = por %p58, %p59
      %p61 = scmp.ne.s32.totalorder %s52, %s53
      %p62 = scmp.eq.s32.totalorder %s21, 0
      %p63 = por %p61, %p62
      %p64 = scmp.ne.s32.totalorder %s52, %s53
      %p65 = scmp.eq.s32.totalorder %s22, 1
      %p66 = por %p64, %p65
      %p68 = scmp.ne.s32.totalorder %s53, %s67
      %p69 = scmp.eq.s32.totalorder %s22, 0
      %p70 = por %p68, %p69
      %s72 = sadd.s32 %s71, 1
      %p75 = scmp.eq.s32.totalorder %s16, 1
      %p76 = scmp.ne.s32.totalorder %s71, %s73
      %p77 = scmp.eq.s32.totalorder %s16, 0
      %p78 = por %p76, %p77
      %p79 = scmp.ne.s32.totalorder %s71, %s73
      %p80 = scmp.eq.s32.totalorder %s21, 1
      %p81 = por %p79, %p80
      %p82 = scmp.ne.s32.totalorder %s73, %s74
      %p83 = scmp.eq.s32.totalorder %s21, 0
      %p84 = por %p82, %p83
      %p85 = scmp.ne.s32.totalorder %s73, %s74
      %p86 = scmp.eq.s32.totalorder %s22, 1
      %p87 = por %p85, %p86
      %p89 = scmp.ne.s32.totalorder %s74, %s88
      %p90 = scmp.eq.s32.totalorder %s22, 0
      %p91 = por %p89, %p90
      %s92 = ssub.s32 %s16, %s23
      %p93 = scmp.eq.s32.totalorder %s92, 0
      %s95 = sadd.s32 %s94, 1
      %s96 = scalar_select %p93, %s94, %s95
      %p99 = pneg %p93
      %p100 = scmp.eq.s32.totalorder %s16, 1
      %p101 = por %p99, %p100
      %p102 = scmp.ne.s32.totalorder %s94, %s97
      %p103 = scmp.eq.s32.totalorder %s16, 0
      %p104 = por %p102, %p103
      %p105 = scmp.ne.s32.totalorder %s94, %s97
      %p106 = scmp.eq.s32.totalorder %s21, 1
      %p107 = por %p105, %p106
      %p108 = scmp.ne.s32.totalorder %s97, %s98
      %p109 = scmp.eq.s32.totalorder %s21, 0
      %p110 = por %p108, %p109
      %p111 = scmp.ne.s32.totalorder %s97, %s98
      %p112 = scmp.eq.s32.totalorder %s22, 1
      %p113 = por %p111, %p112
      %p115 = scmp.ne.s32.totalorder %s98, %s114
      %p116 = scmp.eq.s32.totalorder %s22, 0
      %p117 = por %p115, %p116
      %p118 = scmp.le.s32.totalorder 1, %s16
      %p119 = scmp.lt.s32.totalorder %s16, 3
      %p120 = pnand %p118, %p119
      %p121 = pneg %p120
      // Predicated region
      $region9: #{tpu_custom_call.1} parent=5 // pred_check
        _
      $region10: #{tpu_custom_call.1} parent=5 // pred_check_branch
        %123 = sbr.rel (%p120) target = $region12
      $region11: #{tpu_custom_call.1} parent=5 // pred_region
        %s124 = ssub.s32 %s16, 1
        // Predicated region
        $region13: #{tpu_custom_call.1} parent=11 // pred_check
          %p125 = pneg %p63
        $region14: #{tpu_custom_call.1} parent=11 // pred_check_branch
          %127 = sbr.rel (%p125) target = $region16
        $region15: #{tpu_custom_call.1} parent=11 // pred_region
          %129 = vsyncadd [#allocation6], 0
          %s131 = sshll.u32 %s1, 4
          %s132 = int_to_ptr.hbm [resolvable:$true] %s131
          %s133 = sshll.u32 [#allocation5], 4
          %s134 = int_to_ptr.vmem [resolvable:$true] %s133
          %136 = dma.hbm_to_vmem [thread:$0]  %s132, 16, %s134, [#allocation6]
        $region16: #{tpu_custom_call.1} parent=11 // pred_fallthru
          _
        // Predicated region
        $region17: #{tpu_custom_call.1} parent=11 // pred_check
          %p137 = pneg %p84
        $region18: #{tpu_custom_call.1} parent=11 // pred_check_branch
          %139 = sbr.rel (%p137) target = $region20
        $region19: #{tpu_custom_call.1} parent=11 // pred_region
          _
        $region20: #{tpu_custom_call.1} parent=11 // pred_fallthru
          _
      $region12: #{tpu_custom_call.1} parent=5 // pred_fallthru
        _
      %p140 = scmp.lt.s32.totalorder %s16, 2
      // Predicated region
      $region21: #{tpu_custom_call.1} parent=5 // pred_check
        %p141 = pneg %p140
      $region22: #{tpu_custom_call.1} parent=5 // pred_check_branch
        %143 = sbr.rel (%p141) target = $region24
      $region23: #{tpu_custom_call.1} parent=5 // pred_region
        // Predicated region
        $region25: #{tpu_custom_call.1} parent=23 // pred_check
          %p144 = pneg %p36
        $region26: #{tpu_custom_call.1} parent=23 // pred_check_branch
          %146 = sbr.rel (%p144) target = $region28
        $region27: #{tpu_custom_call.1} parent=23 // pred_region
          %s147 = sand.u32 %s26, 1
          %s148 = scalar_lea.sflag [#allocation3], %s147
          %s149 = sand.u32 %s26, 1
          %s150 = smul.addr %s149, 64
          %s151 = scalar_lea.vmem [#allocation2], %s150
          %153 = vsyncadd %s148, 0
          %s154 = smul.addr %s16, 8
          %s155 = smul.addr %s154, 8
          %s156 = scalar_lea.hbm %s0, %s155
          %s157 = sshll.u32 %s156, 4
          %s158 = int_to_ptr.hbm [resolvable:$true] %s157
          %s159 = sshll.u32 %s151, 4
          %s160 = int_to_ptr.vmem [resolvable:$true] %s159
          %165 = dma.hbm_to_vmem [thread:$0]  %s158, 1024, %s160, %s148, 128, 128, 8
        $region28: #{tpu_custom_call.1} parent=23 // pred_fallthru
          _
      $region24: #{tpu_custom_call.1} parent=5 // pred_fallthru
        _
      %p166 = scmp.le.s32.totalorder 1, %s16
      %p167 = scmp.lt.s32.totalorder %s16, 3
      %p168 = pnand %p166, %p167
      %p169 = pneg %p168
      // Predicated region
      $region29: #{tpu_custom_call.1} parent=5 // pred_check
        _
      $region30: #{tpu_custom_call.1} parent=5 // pred_check_branch
        %171 = sbr.rel (%p168) target = $region32
      $region31: #{tpu_custom_call.1} parent=5 // pred_region
        %s172 = ssub.s32 %s16, 1
        %s173 = sand.u32 %s29, 1
        %s174 = scalar_lea.sflag [#allocation3], %s173
        %s175 = sand.u32 %s29, 1
        %s176 = smul.addr %s175, 64
        %s177 = scalar_lea.vmem [#allocation2], %s176
        // Predicated region
        $region33: #{tpu_custom_call.1} parent=31 // pred_check
          %p178 = pneg %p42
        $region34: #{tpu_custom_call.1} parent=31 // pred_check_branch
          %180 = sbr.rel (%p178) target = $region36
        $region35: #{tpu_custom_call.1} parent=31 // pred_region
          %182 = dma.done %s174, 1024
        $region36: #{tpu_custom_call.1} parent=31 // pred_fallthru
          _
        // Predicated region
        $region37: #{tpu_custom_call.1} parent=31 // pred_check
          %p183 = pneg %p63
        $region38: #{tpu_custom_call.1} parent=31 // pred_check_branch
          %185 = sbr.rel (%p183) target = $region40
        $region39: #{tpu_custom_call.1} parent=31 // pred_region
          %187 = dma.done [#allocation6], 16
        $region40: #{tpu_custom_call.1} parent=31 // pred_fallthru
          _
        %s188 = sand.u32 %s29, 1
        %s189 = scalar_lea.sflag [#allocation3], %s188
        %s190 = sand.u32 %s29, 1
        %s191 = smul.addr %s190, 64
        %s192 = scalar_lea.vmem [#allocation2], %s191
        %p193 = pneg %p42
        %p194 = pneg %p39
        %p195 = pneg %p63
        %p196 = pneg %p60
        %p197 = pneg %p84
        %p198 = pneg %p81
        %p199 = pneg %p110
        %p200 = pneg %p107
        %s201 = sand.u32 %s97, 1
        %s202 = scalar_lea.sflag [#allocation4], %s201
        %s203 = sand.u32 %s97, 1
        %s204 = smul.addr %s203, 64
        %s205 = scalar_lea.vmem [#allocation7], %s204
        %v206 = vld [vmem:[%s177] sm:$0xff]
        %v207 = vld [vmem:[%s177 + $0x8] sm:$0xff]
        %v208 = vld [vmem:[%s177 + $0x10] sm:$0xff]
        %v209 = vld [vmem:[%s177 + $0x18] sm:$0xff]
        %v210 = vld [vmem:[%s177 + $0x20] sm:$0xff]
        %v211 = vld [vmem:[%s177 + $0x28] sm:$0xff]
        %v212 = vld [vmem:[%s177 + $0x30] sm:$0xff]
        %v213 = vld [vmem:[%s177 + $0x38] sm:$0xff]
        %v214 = vmul.f32 %v206, %v206
        %v215 = vmul.f32 %v207, %v207
        %v216 = vmul.f32 %v208, %v208
        %v217 = vmul.f32 %v209, %v209
        %v218 = vmul.f32 %v210, %v210
        %v219 = vmul.f32 %v211, %v211
        %v220 = vmul.f32 %v212, %v212
        %v221 = vmul.f32 %v213, %v213
        %v222 = vadd.f32 %v214, %v215
        %v223 = vadd.f32 %v222, %v216
        %v224 = vadd.f32 %v223, %v217
        %v225 = vadd.f32 %v224, %v218
        %v226 = vadd.f32 %v225, %v219
        %v227 = vadd.f32 %v226, %v220
        %v228 = vadd.f32 %v227, %v221
        %v229 = vrot.slane %v228, 4
        %v230 = vadd.f32 %v228, %v229
        %v231 = vrot.slane %v230, 2
        %v232 = vadd.f32 %v230, %v231
        %v233 = vrot.slane %v232, 1
        %v234 = vadd.f32 %v232, %v233
        %235 = vrot.lane.b32.xlu0 %v234, 32
        %v236 = vpop.permute.xlu0 %235
        %v237 = vadd.f32 %v234, %v236
        %238 = vrot.lane.b32.xlu0 %v237, 64
        %v239 = vpop.permute.xlu0 %238
        %v240 = vadd.f32 %v237, %v239
        %v241 = vrsqrt.pop %v240
        %v242 = vmul.f32 %v241, %v240
        %v243 = vmul.f32 %v242, %v241
        %v244 = vmul.f32 0.5, %v243
        %v245 = vsub.f32 1.5, %v244
        %v246 = vmul.f32 %v241, %v245
        %v247 = vmul.f32 %v240, %v246
        %vm248 = vcmp.eq.f32.partialorder %v240, inf
        %v249 = vsel %vm248, %v240, %v247
        %vm250 = vcmp.eq.f32.partialorder %v240, 0.0
        %v251 = vand.u32 %v240, 2147483648
        %v252 = vsel %vm250, %v251, %v249
        %vm253 = vcmask 1040384
        %v254 = vsel %vm253, %v252, 0.0
        %255 = vadd.xlane.f32.xlu0 %v254
        %v256 = vpop.xlane.xlu0 %255
        %v257 = vrcp.pop 128.0
        %v258 = vmul.f32 128.0, %v257
        %v259 = vsub.f32 1.0, %v258
        %v260 = vmul.f32 %v257, %v259
        %v261 = vadd.f32 %v257, %v260
        %vm262 = vweird.f32 %v257
        %v263 = vsel %vm262, %v257, %v261
        %v264 = vmul.f32 %v256, %v263
        %v265 = vadd.f32 %v264, 1e-06
        %v266 = vrcp.pop %v265
        %v267 = vmul.f32 %v265, %v266
        %v268 = vsub.f32 1.0, %v267
        %v269 = vmul.f32 %v266, %v268
        %v270 = vadd.f32 %v266, %v269
        %vm271 = vweird.f32 %v265
        %vm272 = vweird.f32 %v266
        %vm273 = vmor %vm271, %vm272
        %v274 = vsel %vm273, %v266, %v270
        %v275 = vand.u32 2147483647, %v265
        %vm276 = vcmp.eq.f32.partialorder %v275, 8.507059e+37
        %v277 = vand.u32 %v265, 2147483648
        %v278 = vor.u32 1.1754944e-38, %v277
        %v279 = vsel %vm276, %v278, %v274
        %v280 = vmul.f32 %v252, %v279
        %v281 = vld [vmem:[#allocation5] sm:$0x1]
        %v282 = vmul.f32 %v281, %v280
        %v283 = vadd.f32 %v282, 1.0
        %v285 = vperm.slane %v283, 0
        %v287 = vmul.f32 %v206, %v285
        %v288 = vmul.f32 %v207, %v285
        %v289 = vmul.f32 %v208, %v285
        %v290 = vmul.f32 %v209, %v285
        %v291 = vmul.f32 %v210, %v285
        %v292 = vmul.f32 %v211, %v285
        %v293 = vmul.f32 %v212, %v285
        %v294 = vmul.f32 %v213, %v285
        %v295 = vld [vmem:[%s2] sm:$0x1]
        %v297 = vperm.slane %v295, 0
        %v299 = vadd.f32 %v287, %v297
        %v300 = vadd.f32 %v288, %v297
        %v301 = vadd.f32 %v289, %v297
        %v302 = vadd.f32 %v290, %v297
        %v303 = vadd.f32 %v291, %v297
        %v304 = vadd.f32 %v292, %v297
        %v305 = vadd.f32 %v293, %v297
        %v306 = vadd.f32 %v294, %v297
        %307 = vst [vmem:[%s205] sm:$0xff] %v299
        %308 = vst [vmem:[%s205 + $0x8] sm:$0xff] %v300
        %309 = vst [vmem:[%s205 + $0x10] sm:$0xff] %v301
        %310 = vst [vmem:[%s205 + $0x18] sm:$0xff] %v302
        %311 = vst [vmem:[%s205 + $0x20] sm:$0xff] %v303
        %312 = vst [vmem:[%s205 + $0x28] sm:$0xff] %v304
        %313 = vst [vmem:[%s205 + $0x30] sm:$0xff] %v305
        %314 = vst [vmem:[%s205 + $0x38] sm:$0xff] %v306
        %s315 = sand.u32 %s97, 1
        %s316 = scalar_lea.sflag [#allocation4], %s315
        %s317 = sand.u32 %s97, 1
        %s318 = smul.addr %s317, 64
        %s319 = scalar_lea.vmem [#allocation7], %s318
        // Predicated region
        $region41: #{tpu_custom_call.1} parent=31 // pred_check
          %p320 = pneg %p107
        $region42: #{tpu_custom_call.1} parent=31 // pred_check_branch
          %322 = sbr.rel (%p320) target = $region44
        $region43: #{tpu_custom_call.1} parent=31 // pred_region
          %324 = vsyncadd %s316, 0
          %s325 = smul.addr %s21, 8
          %s326 = smul.addr %s325, 8
          %s327 = scalar_lea.hbm %s3, %s326
          %s328 = sshll.u32 %s319, 4
          %s329 = int_to_ptr.vmem [resolvable:$true] %s328
          %s330 = sshll.u32 %s327, 4
          %s331 = int_to_ptr.hbm [resolvable:$true] %s330
          %336 = dma.vmem_to_hbm [thread:$0]  %s329, 1024, %s331, %s316, 128, 128, 8
        $region44: #{tpu_custom_call.1} parent=31 // pred_fallthru
          _
      $region32: #{tpu_custom_call.1} parent=5 // pred_fallthru
        _
      %p337 = scmp.le.s32.totalorder 2, %s16
      // Predicated region
      $region45: #{tpu_custom_call.1} parent=5 // pred_check
        %p338 = pneg %p337
      $region46: #{tpu_custom_call.1} parent=5 // pred_check_branch
        %340 = sbr.rel (%p338) target = $region48
      $region47: #{tpu_custom_call.1} parent=5 // pred_region
        %s341 = ssub.s32 %s16, 2
        // Predicated region
        $region49: #{tpu_custom_call.1} parent=47 // pred_check
          %p342 = pneg %p113
        $region50: #{tpu_custom_call.1} parent=47 // pred_check_branch
          %344 = sbr.rel (%p342) target = $region52
        $region51: #{tpu_custom_call.1} parent=47 // pred_region
          %s345 = sand.u32 %s98, 1
          %s346 = scalar_lea.sflag [#allocation4], %s345
          %s347 = sand.u32 %s98, 1
          %s348 = smul.addr %s347, 64
          %s349 = scalar_lea.vmem [#allocation7], %s348
          %351 = dma.done %s346, 1024
        $region52: #{tpu_custom_call.1} parent=47 // pred_fallthru
          _
      $region48: #{tpu_custom_call.1} parent=5 // pred_fallthru
        _
    $region6: #{tpu_custom_call.1} parent=1 // loop_footer
      %s20 = sadd.s32 1, %s16
    $region7: #{tpu_custom_call.1} parent=1 // loop_footer_branch
      %15 = sbr.rel target = $region3
    $region8: #{tpu_custom_call.1} parent=1 // loop_exit
      _
    %352 = vsyncpa [#allocation3], 1
    %s353 = scalar_lea.sflag [#allocation3], 1
    %354 = vsyncpa %s353, 1
    %355 = vsyncpa [#allocation6], 1
    %356 = vsyncpa [#allocation4], 1
    %s357 = scalar_lea.sflag [#allocation4], 1
    %358 = vsyncpa %s357, 1

</llo_original>
